<compile_context>
chip_gen: v7x
topology: tpu7x:2x2x1
jax: 0.10.0
libtpu: 0.0.40
codegen_flags: <defaults>
</compile_context>

<pallas_src>
import jax
import jax.numpy as jnp
from jax.experimental import pallas as pl
from jax.experimental.pallas import tpu as pltpu

_LANE = 128


def _mish_kernel(x_ref, o_ref):
    x = x_ref[...].astype(jnp.float32)
    # Stable single-exp rational form of tanh(softplus(x)) with t = exp(-|x|):
    #   x >= 0:  (1 + 2t)   / (1 + 2t + 2t^2)
    #   x <  0:  (2t + t^2) / (2 + 2t + t^2)
    t = jnp.exp(-jnp.abs(x))          # EUP
    t2 = t * t
    two_t = t + t
    pos = x >= 0.0
    num = jnp.where(pos, 1.0 + two_t, two_t + t2)
    den = num + jnp.where(pos, t2 + t2, 2.0)      # same values, fewer VPU ops
    # EUP approx reciprocal + one Newton step (rel err ~1e-7, f32-accurate).
    r = pl.reciprocal(den, approx=True)
    r = r * (2.0 - den * r)
    o_ref[...] = (x * (num * r)).astype(o_ref.dtype)


def _block_config(dtype):
    """Returns (tile_rows, sublane, vmem_limit_bytes or None) for this dtype/chip."""
    itemsize = jnp.dtype(dtype).itemsize
    sub = max(8, 32 // max(itemsize, 1))          # f32->8, bf16->16, int8/fp8->32
    try:
        info = pltpu.get_tpu_info()
        vmem_cap = int(getattr(info, "vmem_capacity_bytes", 128 << 20))
    except Exception:  # pragma: no cover - conservative fallback off-TPU
        vmem_cap = 128 << 20
    if vmem_cap <= (64 << 20):
        # v7x-class: 64 MiB VMEM/TC, ~3.2 TB/s HBM -> amortize per-step overhead
        # with 8 MiB blocks; 4x block (in+out, double-buffered) = 32 MiB, so raise
        # the scoped limit explicitly and leave headroom.
        block_bytes = 8 << 20
        vmem_limit = 48 << 20
    else:
        # v5e/v6e (128 MiB physical): 2 MiB blocks -> 8 MiB total, fits the 16 MiB
        # v5e scoped default and is already ~85%+ of HBM roofline.
        block_bytes = 2 << 20
        vmem_limit = None
    tr = max(sub, (block_bytes // (_LANE * itemsize)) // sub * sub)
    return tr, sub, vmem_limit


def _mish_slab(slab, tile_rows, vmem_limit):
    rows, lane = slab.shape
    n = slab.size
    itemsize = jnp.dtype(slab.dtype).itemsize
    if rows <= tile_rows:
        tr = rows                      # single block == full array dims
    else:
        tr = tile_rows                 # multiple of sublane; ragged last block OK
    extra = {"vmem_limit_bytes": vmem_limit} if vmem_limit is not None else {}
    return pl.pallas_call(
        _mish_kernel,
        out_shape=jax.ShapeDtypeStruct(slab.shape, slab.dtype),
        grid_spec=pltpu.PrefetchScalarGridSpec(
            num_scalar_prefetch=0,
            grid=(pl.cdiv(rows, tr),),
            in_specs=[pl.BlockSpec((tr, lane), lambda i: (i, 0))],
            out_specs=pl.BlockSpec((tr, lane), lambda i: (i, 0)),
        ),
        compiler_params=pltpu.CompilerParams(
            # On v7x (2 TCs) this lets the grid shard across both cores; no-op
            # on single-TC v5e/v6e.
            dimension_semantics=("parallel",),
            **extra,
        ),
        cost_estimate=pl.CostEstimate(
            flops=12 * n,
            transcendentals=n,
            bytes_accessed=2 * n * itemsize,
        ),
    )(slab)


def _mish_small(x):
    """Plain-JAX Mish for tiny (<128 element) tails / arrays."""
    xf = x.astype(jnp.float32)
    return (xf * jnp.tanh(jax.nn.softplus(xf))).astype(x.dtype)


def mish(x):
    """Elementwise Mish on an arbitrary-shaped array via a Pallas TPU kernel."""
    orig_shape = x.shape
    n = x.size
    if n == 0:
        return x
    tile_rows, _, vmem_limit = _block_config(x.dtype)

    if n % _LANE == 0:
        # Fast path: free reshape, no padding, no post-slice.
        rows = n // _LANE
        out = _mish_slab(x.reshape(rows, _LANE), tile_rows, vmem_limit)
        return out.reshape(orig_shape)

    # Unaligned size: kernel on the aligned prefix, tiny (<128 elem) tail in jnp.
    flat = jnp.ravel(x)
    n_main = (n // _LANE) * _LANE
    if n_main == 0:
        return _mish_small(flat).reshape(orig_shape)
    rows = n_main // _LANE
    main = _mish_slab(flat[:n_main].reshape(rows, _LANE), tile_rows, vmem_limit)
    tail = _mish_small(flat[n_main:])
    return jnp.concatenate([main.reshape(-1), tail]).reshape(orig_shape)


def mish_ref(x):
    xf = x.astype(jnp.float32)
    return (xf * jnp.tanh(jax.nn.softplus(xf))).astype(x.dtype)


if __name__ == "__main__":
    key = jax.random.PRNGKey(0)
    mish_jit = jax.jit(mish)

    # Main test: shape implied by a small conv activation map.
    x = jax.random.normal(key, (2, 4, 16, 16), dtype=jnp.float32) * 3.0
    y = jax.block_until_ready(mish_jit(x))
    y_ref = mish_ref(x)
    assert y.shape == x.shape and y.dtype == x.dtype
    assert jnp.allclose(y, y_ref, atol=1e-5, rtol=5e-5), "mismatch vs reference"

    # Secondary test: unaligned size exercises the prefix + tail path.
    x2 = jax.random.normal(jax.random.PRNGKey(1), (3, 5, 11), dtype=jnp.float32) * 2.0
    y2 = jax.block_until_ready(mish_jit(x2))
    assert y2.shape == x2.shape and y2.dtype == x2.dtype
    assert jnp.allclose(y2, mish_ref(x2), atol=1e-5, rtol=5e-5), "tail-path mismatch"

    print("KERNEL_OK")
</pallas_src>

<mosaic_0001>
module attributes {stable_mosaic.version = 11 : i64} {
  func.func @_mish_kernel(%arg0: i32, %arg1: memref<16x128xf32, #tpu.memory_space<vmem>>, %arg2: memref<16x128xf32, #tpu.memory_space<vmem>>) attributes {dimension_semantics = [#tpu.dimension_semantics<parallel>], iteration_bounds = array<i64: 1>, scalar_prefetch = 0 : i64, scratch_operands = 0 : i64, tpu.core_type = #tpu.core_type<tc>, window_params = [{transform_indices = @transform_0, window_bounds = array<i64: 16, 128>}, {transform_indices = @transform_1, window_bounds = array<i64: 16, 128>}]} {
    %c0 = arith.constant 0 : index
    %c0_0 = arith.constant 0 : index
    %0 = vector.load %arg1[%c0, %c0_0] : memref<16x128xf32, #tpu.memory_space<vmem>>, vector<16x128xf32>
    %1 = math.absf %0 : vector<16x128xf32>
    %cst = arith.constant 0.000000e+00 : f32
    %2 = vector.broadcast %cst : f32 to vector<16x128xf32>
    %3 = arith.subf %2, %1 : vector<16x128xf32>
    %4 = math.exp %3 : vector<16x128xf32>
    %5 = arith.mulf %4, %4 : vector<16x128xf32>
    %6 = arith.addf %4, %4 : vector<16x128xf32>
    %cst_1 = arith.constant 0.000000e+00 : f32
    %7 = vector.broadcast %cst_1 : f32 to vector<16x128xf32>
    %8 = arith.cmpf oge, %0, %7 : vector<16x128xf32>
    %cst_2 = arith.constant 1.000000e+00 : f32
    %9 = vector.broadcast %cst_2 : f32 to vector<16x128xf32>
    %10 = arith.addf %9, %6 : vector<16x128xf32>
    %11 = arith.addf %6, %5 : vector<16x128xf32>
    %12 = arith.select %8, %10, %11 : vector<16x128xi1>, vector<16x128xf32>
    %13 = arith.addf %5, %5 : vector<16x128xf32>
    %cst_3 = arith.constant 2.000000e+00 : f32
    %14 = vector.broadcast %cst_3 : f32 to vector<16x128xf32>
    %15 = arith.select %8, %13, %14 : vector<16x128xi1>, vector<16x128xf32>
    %16 = arith.addf %12, %15 : vector<16x128xf32>
    %17 = tpu.reciprocal %16 {approx = true} : vector<16x128xf32> -> vector<16x128xf32>
    %18 = arith.mulf %16, %17 : vector<16x128xf32>
    %cst_4 = arith.constant 2.000000e+00 : f32
    %19 = vector.broadcast %cst_4 : f32 to vector<16x128xf32>
    %20 = arith.subf %19, %18 : vector<16x128xf32>
    %21 = arith.mulf %17, %20 : vector<16x128xf32>
    %22 = arith.mulf %12, %21 : vector<16x128xf32>
    %23 = arith.mulf %0, %22 : vector<16x128xf32>
    %c0_5 = arith.constant 0 : index
    %c0_6 = arith.constant 0 : index
    %24 = vector.load %arg2[%c0_5, %c0_6] : memref<16x128xf32, #tpu.memory_space<vmem>>, vector<16x128xf32>
    tpu.vector_store %arg2[%c0_5, %c0_6], %23 {strides = array<i32>} : memref<16x128xf32, #tpu.memory_space<vmem>>, vector<16x128xf32>,
    return
  }
  func.func @transform_0(%arg0: i32) -> (i32, i32) {
    %c0_i32 = arith.constant 0 : i32
    %c0_i32_0 = arith.constant 0 : i32
    return %arg0, %c0_i32 : i32, i32
  }
  func.func @transform_1(%arg0: i32) -> (i32, i32) {
    %c0_i32 = arith.constant 0 : i32
    %c0_i32_0 = arith.constant 0 : i32
    return %arg0, %c0_i32 : i32, i32
  }
}

</mosaic_0001>

<llo_original>
// kernel: mish.1
$region0: #{mish.1}
  #allocation0 [shape = 'u32[]', space=smem, size = 0x4, offset = 0x4, fixed_abs, tag = 'smem constant byte address 0x4 - core index']
  #allocation1 [shape = 'u32[144,128]{1,0:T(1,128)}', space=vmem, size = 0x12000, scoped, tag = 'internal scratch']
  %s0 = inlined_call_operand.vmem [shape: f32[16,128], index: 0, kind: input, shape index: {}]
  %s1 = inlined_call_operand.vmem [shape: f32[16,128], index: 1, kind: output, shape index: {}]
  %s2 = sld [smem:[#allocation0]]
  $region14: #{mish.1} parent=0
    _
  %s4 = ssub.s32 1, %s2
  %s5 = scalar_select 0, %s4, %s2
  // Predicated region
  $region2: #{mish.1} parent=0 // pred_check
    _
  $region3: #{mish.1} parent=0 // pred_check_branch
    %7 = sbr.rel (0) target = $region5
  $region4: #{mish.1} parent=0 // pred_region
    _
  $region5: #{mish.1} parent=0 // pred_fallthru
    _
  %v8 = vld [vmem:[%s0] sm:$0xff]
  %v9 = vld [vmem:[%s0 + $0x8] sm:$0xff]
  %v10 = vand.u32 2147483647, %v8
  %v11 = vand.u32 2147483647, %v9
  %v12 = vsub.f32 0.0, %v10
  %v13 = vsub.f32 0.0, %v11
  %v14 = vmul.f32 %v12, 1.442695
  %v15 = vpow.pop %v14
  %v16 = vmul.f32 %v13, 1.442695
  %v17 = vpow.pop %v16
  %v18 = vmul.f32 %v15, %v15
  %v19 = vmul.f32 %v17, %v17
  %v20 = vadd.f32 %v15, %v15
  %v21 = vadd.f32 %v17, %v17
  %vm22 = vcmp.ge.f32.partialorder %v8, 0.0
  %vm23 = vcmp.ge.f32.partialorder %v9, 0.0
  %v24 = vadd.f32 %v20, 1.0
  %v25 = vadd.f32 %v21, 1.0
  %v26 = vadd.f32 %v20, %v18
  %v27 = vadd.f32 %v21, %v19
  %v28 = vsel %vm22, %v24, %v26
  %v29 = vsel %vm23, %v25, %v27
  %v30 = vadd.f32 %v18, %v18
  %v31 = vadd.f32 %v19, %v19
  %v32 = vsel %vm22, %v30, 2.0
  %v33 = vsel %vm23, %v31, 2.0
  %v34 = vadd.f32 %v28, %v32
  %v35 = vadd.f32 %v29, %v33
  %v36 = vrcp.pop %v34
  %v37 = vrcp.pop %v35
  %v38 = vmul.f32 %v34, %v36
  %v39 = vmul.f32 %v35, %v37
  %v40 = vsub.f32 2.0, %v38
  %v41 = vsub.f32 2.0, %v39
  %v42 = vmul.f32 %v36, %v40
  %v43 = vmul.f32 %v37, %v41
  %v44 = vmul.f32 %v28, %v42
  %v45 = vmul.f32 %v29, %v43
  %v46 = vmul.f32 %v8, %v44
  %v47 = vmul.f32 %v9, %v45
  %48 = vst [vmem:[%s1] sm:$0xff] %v46
  %49 = vst [vmem:[%s1 + $0x8] sm:$0xff] %v47
  // Predicated region
  $region6: #{mish.1} parent=0 // pred_check
    _
  $region7: #{mish.1} parent=0 // pred_check_branch
    %51 = sbr.rel (0) target = $region9
  $region8: #{mish.1} parent=0 // pred_region
    _
  $region9: #{mish.1} parent=0 // pred_fallthru
    _
  // Predicated region
  $region10: #{mish.1} parent=0 // pred_check
    _
  $region11: #{mish.1} parent=0 // pred_check_branch
    %53 = sbr.rel (0) target = $region13
  $region12: #{mish.1} parent=0 // pred_region
    _
  $region13: #{mish.1} parent=0 // pred_fallthru
    _

</llo_original>
